<compile_context>
chip_gen: v6e
topology: v6e:2x2x1
jax: 0.10.0
libtpu: 0.0.40
codegen_flags: <defaults>
</compile_context>

<pallas_src>
import functools

import jax
import jax.numpy as jnp
from jax.experimental import pallas as pl
from jax.experimental.pallas import tpu as pltpu

_LANE = 128
# Per-tile VMEM budget.  With input+output each double-buffered that's 4 live
# tiles -> <= 8 MiB, safe on every chip (v5e 16 MiB scoped .. v7x 32 MiB).
_MAX_TILE_BYTES = 2 * 1024 * 1024


def _ewise_kernel(fcn, x_ref, o_ref):
    # Hot path: apply the wrapped function elementwise on the VMEM tile.
    o_ref[...] = fcn(x_ref[...]).astype(o_ref.dtype)


def _pick_lane_width(total):
    """Choose a lane width L (multiple of 128) and padding for the flat view.

    Prefer an L that also leaves >= 8 rows so both lanes and sublanes of each
    vreg are filled; fall back to any 128-multiple divisor, then to padding.
    """
    for L in (1024, 512, 256, 128):
        if total % L == 0 and total // L >= 8:
            return L, 0
    for L in (1024, 512, 256, 128):
        if total % L == 0:
            return L, 0
    pad = (-total) % _LANE
    return _LANE, pad


def module_wrapper_forward(fcn, x):
    """Pallas equivalent of ModuleWrapperClass(fcn).forward(x).

    Works for any elementwise jnp-compatible `fcn`.  Non-elementwise fcns
    (e.g. shape-changing ones) are out of scope for this generic kernel.
    """
    orig_shape = x.shape
    total = x.size
    if total == 0:
        # Degenerate empty tensor: a (0, L) block will not lower; skip the kernel.
        return fcn(x)

    L, pad = _pick_lane_width(total)
    flat = x.reshape(-1)
    if pad:
        flat = jnp.pad(flat, (0, pad))
    rows = flat.size // L
    x2d = flat.reshape(rows, L)

    itemsize = jnp.dtype(x.dtype).itemsize
    # Rows per tile: multiple of 8 (full sublanes; also a multiple of 16 for
    # packed bf16), capped by the per-tile VMEM budget and at 1024 rows.
    tile_r = max(16, min(1024, (_MAX_TILE_BYTES // (L * itemsize)) // 16 * 16))

    if rows <= tile_r:
        # Tiny input fast path: single full-extent block (exempt from the
        # (8,128) divisibility rule).
        block_rows = rows
        grid = (1,)
    else:
        block_rows = tile_r
        # Uneven last block is fine: block_shape is (8,128)-aligned and Pallas
        # masks the partial writeback.
        grid = (pl.cdiv(rows, tile_r),)

    out2d = pl.pallas_call(
        functools.partial(_ewise_kernel, fcn),
        out_shape=jax.ShapeDtypeStruct(x2d.shape, x2d.dtype),
        grid=grid,
        in_specs=[pl.BlockSpec((block_rows, L), lambda i: (i, 0))],
        out_specs=pl.BlockSpec((block_rows, L), lambda i: (i, 0)),
        compiler_params=pltpu.CompilerParams(
            # "parallel" lets v7x shard the tile loop across both TensorCores;
            # neutral on single-TC v5e/v6e.
            dimension_semantics=("parallel",),
        ),
    )(x2d)

    out_flat = out2d.reshape(-1)
    if pad:
        out_flat = out_flat[:total]
    return out_flat.reshape(orig_shape)


if __name__ == "__main__":
    # The wrapped callable (what `fcn` is in the PyTorch module).
    def gelu_fcn(v):
        return jax.nn.gelu(v, approximate=True)
    # TODO(synk): torch.nn.functional.gelu defaults to the exact erf form;
    # use approximate=False if exact-erf parity with PyTorch is required.

    key = jax.random.PRNGKey(0)
    # Small NCHW input consistent with a vision-model activation.
    x = jax.random.normal(key, (2, 4, 16, 16), dtype=jnp.float32)

    y = module_wrapper_forward(gelu_fcn, x)
    y = jax.block_until_ready(y)

    # Reference check: the wrapper must be exactly fcn(input).
    y_ref = gelu_fcn(x)
    assert y.shape == x.shape and y.dtype == x.dtype
    assert jnp.allclose(y, y_ref, atol=1e-5, rtol=1e-5)

    print("KERNEL_OK")
</pallas_src>

<mosaic_0001>
module attributes {stable_mosaic.version = 11 : i64} {
  func.func @_ewise_kernel(%arg0: i32, %arg1: memref<8x256xf32, #tpu.memory_space<vmem>>, %arg2: memref<8x256xf32, #tpu.memory_space<vmem>>) attributes {dimension_semantics = [#tpu.dimension_semantics<parallel>], iteration_bounds = array<i64: 1>, scalar_prefetch = 0 : i64, scratch_operands = 0 : i64, tpu.core_type = #tpu.core_type<tc>, window_params = [{transform_indices = @transform_0, window_bounds = array<i64: 8, 256>}, {transform_indices = @transform_1, window_bounds = array<i64: 8, 256>}]} {
    %c0 = arith.constant 0 : index
    %c0_0 = arith.constant 0 : index
    %0 = vector.load %arg1[%c0, %c0_0] : memref<8x256xf32, #tpu.memory_space<vmem>>, vector<8x256xf32>
    %1 = arith.mulf %0, %0 : vector<8x256xf32>
    %2 = arith.mulf %0, %1 : vector<8x256xf32>
    %cst = arith.constant 4.471500e-02 : f32
    %3 = vector.broadcast %cst : f32 to vector<8x256xf32>
    %4 = arith.mulf %3, %2 : vector<8x256xf32>
    %5 = arith.addf %0, %4 : vector<8x256xf32>
    %cst_1 = arith.constant 0.797884583 : f32
    %6 = vector.broadcast %cst_1 : f32 to vector<8x256xf32>
    %7 = arith.mulf %6, %5 : vector<8x256xf32>
    %8 = math.tanh %7 : vector<8x256xf32>
    %cst_2 = arith.constant 1.000000e+00 : f32
    %9 = vector.broadcast %cst_2 : f32 to vector<8x256xf32>
    %10 = arith.addf %9, %8 : vector<8x256xf32>
    %cst_3 = arith.constant 5.000000e-01 : f32
    %11 = vector.broadcast %cst_3 : f32 to vector<8x256xf32>
    %12 = arith.mulf %11, %10 : vector<8x256xf32>
    %13 = arith.mulf %0, %12 : vector<8x256xf32>
    %c0_4 = arith.constant 0 : index
    %c0_5 = arith.constant 0 : index
    %14 = vector.load %arg2[%c0_4, %c0_5] : memref<8x256xf32, #tpu.memory_space<vmem>>, vector<8x256xf32>
    tpu.vector_store %arg2[%c0_4, %c0_5], %13 {strides = array<i32>} : memref<8x256xf32, #tpu.memory_space<vmem>>, vector<8x256xf32>,
    return
  }
  func.func @transform_0(%arg0: i32) -> (i32, i32) {
    %c0_i32 = arith.constant 0 : i32
    %c0_i32_0 = arith.constant 0 : i32
    return %arg0, %c0_i32 : i32, i32
  }
  func.func @transform_1(%arg0: i32) -> (i32, i32) {
    %c0_i32 = arith.constant 0 : i32
    %c0_i32_0 = arith.constant 0 : i32
    return %arg0, %c0_i32 : i32, i32
  }
}

</mosaic_0001>

<llo_original>
// kernel: tpu_custom_call.1
$region0: #{tpu_custom_call.1}
  #allocation0 [shape = 'u32[]', space=smem, size = 0x4, offset = 0x4, fixed_abs, tag = 'smem constant byte address 0x4 - core index']
  #allocation1 [shape = 'u32[144,128]{1,0:T(1,128)}', space=vmem, size = 0x12000, scoped, tag = 'internal scratch']
  %s0 = inlined_call_operand.hbm [shape: f32[8,256], index: 0, kind: input, shape index: {}]
  %s1 = inlined_call_operand.hbm [shape: f32[8,256], index: 1, kind: output, shape index: {}]
  %s2 = sld [smem:[#allocation0]]
  $region18: #{tpu_custom_call.1} parent=0
    _
  %s4 = ssub.s32 1, %s2
  %s5 = scalar_select 0, %s4, %s2
  $region1: #{tpu_custom_call.1} parent=0
    #allocation2 [shape = 'u8[8192]{0}', space=vmem, size = 0x2000, scoped, tag = 'input window, operand 0, single buffered']
    #allocation3 [shape = 's32[1]{0}', space=sflag, size = 0x4, scoped, tag = 'scoped memory for tpu_custom_call.1']
    #allocation4 [shape = 's32[1]{0}', space=sflag, size = 0x4, scoped, tag = 'scoped memory for tpu_custom_call.1']
    #allocation5 [shape = 'u8[8192]{0}', space=vmem, size = 0x2000, scoped, tag = 'output window, operand 0, single buffered']
    %6 = vsyncpa [#allocation3], 0
    %7 = vsyncpa [#allocation4], 0
    // Predicated region
    $region2: #{tpu_custom_call.1} parent=1 // pred_check
      _
    $region3: #{tpu_custom_call.1} parent=1 // pred_check_branch
      %9 = sbr.rel (0) target = $region5
    $region4: #{tpu_custom_call.1} parent=1 // pred_region
      %s11 = ssub.s32 256, 256
      %12 = vsyncadd [#allocation3], %s11
      %s14 = sshll.u32 [#allocation2], 4
      %s15 = int_to_ptr.vmem [resolvable:$true] %s14
      %17 = dma.hbm_to_vmem [thread:$0]  %s0, 256, %s15, [#allocation3]
    $region5: #{tpu_custom_call.1} parent=1 // pred_fallthru
      _
    // Predicated region
    $region6: #{tpu_custom_call.1} parent=1 // pred_check
      _
    $region7: #{tpu_custom_call.1} parent=1 // pred_check_branch
      %19 = sbr.rel (0) target = $region9
    $region8: #{tpu_custom_call.1} parent=1 // pred_region
      %20 = dma.done [#allocation3], 256
    $region9: #{tpu_custom_call.1} parent=1 // pred_fallthru
      _
    %v21 = vld [vmem:[#allocation2] sm:$0xff]
    %v22 = vld [vmem:[#allocation2 + $0x8] sm:$0xff]
    %v23 = vmul.f32 %v21, %v21
    %v24 = vmul.f32 %v22, %v22
    %v25 = vmul.f32 %v21, %v23
    %v26 = vmul.f32 %v22, %v24
    %v27 = vmul.f32 %v25, 0.044715
    %v28 = vmul.f32 %v26, 0.044715
    %v29 = vadd.f32 %v21, %v27
    %v30 = vadd.f32 %v22, %v28
    %v31 = vmul.f32 %v29, 0.7978846
    %v32 = vmul.f32 %v30, 0.7978846
    %v33 = vtanh.pop %v31
    %v34 = vtanh.pop %v32
    %v35 = vadd.f32 %v33, 1.0
    %v36 = vadd.f32 %v34, 1.0
    %v37 = vmul.f32 %v35, 0.5
    %v38 = vmul.f32 %v36, 0.5
    %v39 = vmul.f32 %v21, %v37
    %v40 = vmul.f32 %v22, %v38
    %41 = vst [vmem:[#allocation5] sm:$0xff] %v39
    %42 = vst [vmem:[#allocation5 + $0x8] sm:$0xff] %v40
    // Predicated region
    $region10: #{tpu_custom_call.1} parent=1 // pred_check
      _
    $region11: #{tpu_custom_call.1} parent=1 // pred_check_branch
      %44 = sbr.rel (0) target = $region13
    $region12: #{tpu_custom_call.1} parent=1 // pred_region
      %s46 = ssub.s32 256, 256
      %47 = vsyncadd [#allocation4], %s46
      %s49 = sshll.u32 [#allocation5], 4
      %s50 = int_to_ptr.vmem [resolvable:$true] %s49
      %52 = dma.vmem_to_hbm [thread:$0]  %s50, 256, %s1, [#allocation4]
    $region13: #{tpu_custom_call.1} parent=1 // pred_fallthru
      _
    // Predicated region
    $region14: #{tpu_custom_call.1} parent=1 // pred_check
      _
    $region15: #{tpu_custom_call.1} parent=1 // pred_check_branch
      %54 = sbr.rel (0) target = $region17
    $region16: #{tpu_custom_call.1} parent=1 // pred_region
      %55 = dma.done [#allocation4], 256
    $region17: #{tpu_custom_call.1} parent=1 // pred_fallthru
      _
    %56 = vsyncpa [#allocation3], 1
    %57 = vsyncpa [#allocation4], 1

</llo_original>
